<compile_context>
chip_gen: v5e
topology: v5e:2x2
jax: 0.10.0
libtpu: 0.0.40
codegen_flags: <defaults>
</compile_context>

<pallas_src>
import jax
import jax.numpy as jnp
from jax.experimental import pallas as pl
from jax.experimental.pallas import tpu as pltpu


# ----------------------------------------------------------------------------
# Stand-in for PresetIndexesHelper: static index bookkeeping only (no tensors).
# ----------------------------------------------------------------------------
class PresetIndexesHelper:
    def __init__(self, num_indexes, cat_indexes, total_dim):
        self._num = list(num_indexes)
        self._cat = [list(g) for g in cat_indexes]
        self.total_dim = total_dim

    def get_numerical_learnable_indexes(self):
        return self._num

    def get_categorical_learnable_indexes(self):
        return self._cat


def _round_up(a, b):
    return (a + b - 1) // b * b


# ----------------------------------------------------------------------------
# Kernels (one [TB, D] batch tile per grid step)
# ----------------------------------------------------------------------------
def _clip_kernel(x_ref, o_ref):
    # cat_softmax_activation=False: Hardtanh(0, 1) on the whole vector.
    o_ref[...] = jnp.clip(x_ref[...], 0.0, 1.0).astype(o_ref.dtype)


def _masked_clip_kernel(x_ref, num_mask_ref, o_ref):
    # Hardtanh(0, 1) on numerical columns, passthrough elsewhere (no cat groups).
    x = x_ref[...]
    is_num = num_mask_ref[...] > 0.5
    o_ref[...] = jnp.where(is_num, jnp.clip(x, 0.0, 1.0), x).astype(o_ref.dtype)


def _softmax_act_kernel(x_ref, num_mask_ref, cat_any_ref, cat_masks_ref, o_ref):
    x = x_ref[...].astype(jnp.float32)            # [TB, D]
    is_num = num_mask_ref[...] > 0.5              # [1, D] bool
    is_cat = cat_any_ref[...] > 0.5               # [1, D] bool
    cat_masks = cat_masks_ref[...]                # [G, D] float {0,1}, disjoint groups

    # Numerical columns: Hardtanh(0, 1); other columns pass through (for now).
    out = jnp.where(is_num, jnp.clip(x, 0.0, 1.0), x)

    neg_big = jnp.float32(-1e30)

    # One global stabilizer per row over ALL categorical columns
    # (1 VPU select + 1 XLU reduce instead of G of each, and no shift matmul).
    # The softmax value is mathematically unchanged; the only caveat is exp()
    # underflow for groups whose logits sit > ~87 below the row's categorical
    # max — those groups would come out as zeros instead of tiny softmaxes.
    x_cat = jnp.where(is_cat, x, neg_big)                     # [TB, D]
    shift = jnp.max(x_cat, axis=-1, keepdims=True)            # [TB, 1]

    # Single exp over the tile (EUP); out-of-group columns become exactly 0.
    e = jnp.exp(x_cat - shift)                                # [TB, D]

    hi = jax.lax.Precision.HIGHEST
    # Per-group sums on the MXU (needs f32 accuracy -> HIGHEST).
    group_sums = jax.lax.dot_general(
        e, cat_masks, (((1,), (1,)), ((), ())),
        precision=hi, preferred_element_type=jnp.float32)     # [TB, G]
    # Reciprocal on the small [TB, G] tensor (instead of a full-tile divide),
    # broadcast back to columns through the MXU, then one vmul.
    inv = 1.0 / jnp.maximum(group_sums, jnp.float32(1e-30))   # empty-group guard
    scale = jax.lax.dot_general(
        inv, cat_masks, (((1,), (0,)), ((), ())),
        precision=hi, preferred_element_type=jnp.float32)     # [TB, D]

    out = jnp.where(is_cat, e * scale, out)
    o_ref[...] = out.astype(o_ref.dtype)


# ----------------------------------------------------------------------------
# Tiling / wrapper helpers
# ----------------------------------------------------------------------------
_VMEM_LIMIT = 32 * 1024 * 1024   # explicit scoped-VMEM limit; safe on v5e/v6e/v7x


def _choose_batch_tile(batch, d, itemsize):
    """Pick the batch tile TB.

    Working set per row (bytes):
      - double-buffered in + out tiles : 2 * 2 * itemsize * d
      - ~6 live f32 intermediates      : 6 * 4 * d
    Budget ~20 MiB against the explicit 32 MiB vmem_limit_bytes.
    """
    per_row = (4 * itemsize + 24) * d
    budget = 20 * 1024 * 1024
    tb = max(8, min(512, (budget // max(per_row, 1)) // 8 * 8))
    # Guarantee >= 2 batch tiles when possible so v7x's 2 TensorCores both work.
    if batch > 8:
        tb = min(tb, max(8, _round_up(pl.cdiv(batch, 2), 8)))
    if batch <= tb:
        return batch            # single block == full dim (always legal)
    return tb                   # multiple of 8; ragged last block masked by Pallas


def _compiler_params():
    return pltpu.CompilerParams(
        dimension_semantics=("parallel",),
        vmem_limit_bytes=_VMEM_LIMIT,
    )


def _clip_path(x):
    B, D = x.shape
    TB = _choose_batch_tile(B, D, x.dtype.itemsize)
    return pl.pallas_call(
        _clip_kernel,
        out_shape=jax.ShapeDtypeStruct((B, D), x.dtype),
        grid=(pl.cdiv(B, TB),),
        in_specs=[pl.BlockSpec((TB, D), lambda i: (i, 0))],
        out_specs=pl.BlockSpec((TB, D), lambda i: (i, 0)),
        compiler_params=_compiler_params(),
    )(x)


def _masked_clip_path(x, num_mask):
    B, D = x.shape
    TB = _choose_batch_tile(B, D, x.dtype.itemsize)
    return pl.pallas_call(
        _masked_clip_kernel,
        out_shape=jax.ShapeDtypeStruct((B, D), x.dtype),
        grid=(pl.cdiv(B, TB),),
        in_specs=[
            pl.BlockSpec((TB, D), lambda i: (i, 0)),   # streamed batch tile
            pl.BlockSpec((1, D), lambda i: (0, 0)),    # VMEM-resident mask
        ],
        out_specs=pl.BlockSpec((TB, D), lambda i: (i, 0)),
        compiler_params=_compiler_params(),
    )(x, num_mask)


def _softmax_path(x, num_mask, cat_any, cat_masks):
    B, D = x.shape
    G = cat_masks.shape[0]
    TB = _choose_batch_tile(B, D, x.dtype.itemsize)
    cost = pl.CostEstimate(
        flops=int(4 * B * D * G + 10 * B * D),
        transcendentals=int(B * D + B * G),
        bytes_accessed=int(x.dtype.itemsize * 2 * B * D + 4 * (G + 2) * D),
    )
    return pl.pallas_call(
        _softmax_act_kernel,
        out_shape=jax.ShapeDtypeStruct((B, D), x.dtype),
        grid=(pl.cdiv(B, TB),),
        in_specs=[
            pl.BlockSpec((TB, D), lambda i: (i, 0)),   # streamed batch tile
            pl.BlockSpec((1, D), lambda i: (0, 0)),    # VMEM-resident masks
            pl.BlockSpec((1, D), lambda i: (0, 0)),
            pl.BlockSpec((G, D), lambda i: (0, 0)),
        ],
        out_specs=pl.BlockSpec((TB, D), lambda i: (i, 0)),
        compiler_params=_compiler_params(),
        cost_estimate=cost,
    )(x, num_mask, cat_any, cat_masks)


# ----------------------------------------------------------------------------
# Module-equivalent wrapper
# ----------------------------------------------------------------------------
class PresetActivation:
    """JAX/Pallas equivalent of the PyTorch PresetActivation module."""

    # TODO(synk): only the nn.Hardtanh(0,1) numerical activation is implemented;
    # the nn.Sigmoid alternative from the PyTorch module is not wired up.
    def __init__(self, idx_helper: PresetIndexesHelper, cat_softmax_activation=False):
        self.idx_helper = idx_helper
        self.cat_softmax_activation = cat_softmax_activation
        D = idx_helper.total_dim

        self.num_mask = None
        self.cat_any = None
        self.cat_masks = None
        self.has_cat = False

        if self.cat_softmax_activation:
            num_idx = idx_helper.get_numerical_learnable_indexes()
            cat_idx = [g for g in idx_helper.get_categorical_learnable_indexes() if len(g)]

            # Disjointness check: overlapping groups would sum contributions in
            # the MXU broadcast instead of applying groups sequentially.
            seen = set()
            for grp in cat_idx:
                s = set(grp)
                assert not (seen & s), "categorical groups must be disjoint"
                seen |= s

            num_mask = jnp.zeros((1, D), jnp.float32)
            if len(num_idx):
                num_mask = num_mask.at[0, jnp.array(num_idx, jnp.int32)].set(1.0)
            self.num_mask = num_mask

            self.has_cat = len(cat_idx) > 0
            if self.has_cat:
                rows = []
                for grp in cat_idx:
                    row = jnp.zeros((D,), jnp.float32)
                    row = row.at[jnp.array(grp, jnp.int32)].set(1.0)
                    rows.append(row)
                cat_masks = jnp.stack(rows, axis=0)                       # [G, D]
                self.cat_masks = cat_masks
                self.cat_any = (jnp.sum(cat_masks, axis=0, keepdims=True) > 0.5
                                ).astype(jnp.float32)

    def __call__(self, x):
        if not self.cat_softmax_activation:
            return _clip_path(x)                       # Hardtanh on everything
        if not self.has_cat:
            return _masked_clip_path(x, self.num_mask)  # no softmax machinery
        return _softmax_path(x, self.num_mask, self.cat_any, self.cat_masks)


# ----------------------------------------------------------------------------
# Pure-JAX reference (mirrors the PyTorch in-place indexing semantics)
# ----------------------------------------------------------------------------
def reference(x, num_idx, cat_groups):
    out = x
    if len(num_idx):
        out = out.at[:, jnp.array(num_idx)].set(
            jnp.clip(x[:, jnp.array(num_idx)], 0.0, 1.0))
    for grp in cat_groups:
        gi = jnp.array(grp)
        out = out.at[:, gi].set(jax.nn.softmax(x[:, gi], axis=-1))
    return out


if __name__ == "__main__":
    B, D = 4, 32
    # Synthetic preset layout: scattered numerical indexes + 3 categorical groups.
    num_indexes = [0, 1, 2, 3, 20, 21, 22, 23]
    cat_indexes = [[4, 5, 6, 7, 8, 9],
                   [10, 11, 12, 13, 14, 15, 16, 17, 18, 19],
                   [24, 25, 26, 27, 28, 29, 30, 31]]

    idx_helper = PresetIndexesHelper(num_indexes, cat_indexes, total_dim=D)

    key = jax.random.PRNGKey(0)
    x = 2.0 * jax.random.normal(key, (B, D), dtype=jnp.float32)

    # cat_softmax_activation=True path (Hardtanh on num + per-group softmax).
    act = PresetActivation(idx_helper, cat_softmax_activation=True)
    y = jax.block_until_ready(act(x))
    y_ref = reference(x, num_indexes, cat_indexes)
    assert y.shape == x.shape and y.dtype == x.dtype
    assert jnp.allclose(y, y_ref, atol=1e-5, rtol=1e-5), "mismatch vs reference (softmax path)"

    # cat_softmax_activation=False path (Hardtanh(0,1) on the whole vector).
    act_ht = PresetActivation(idx_helper, cat_softmax_activation=False)
    y2 = jax.block_until_ready(act_ht(x))
    assert jnp.allclose(y2, jnp.clip(x, 0.0, 1.0), atol=1e-6), "mismatch vs reference (hardtanh path)"

    # cat_softmax_activation=True but no categorical groups -> masked-clip path.
    idx_helper_nc = PresetIndexesHelper(num_indexes, [], total_dim=D)
    act_nc = PresetActivation(idx_helper_nc, cat_softmax_activation=True)
    y3 = jax.block_until_ready(act_nc(x))
    y3_ref = reference(x, num_indexes, [])
    assert jnp.allclose(y3, y3_ref, atol=1e-6), "mismatch vs reference (masked-clip path)"

    print("KERNEL_OK")
</pallas_src>

<mosaic_0001>
module attributes {stable_mosaic.version = 11 : i64} {
  func.func @_softmax_act_kernel(%arg0: i32, %arg1: memref<4x32xf32, #tpu.memory_space<vmem>>, %arg2: memref<1x32xf32, #tpu.memory_space<vmem>>, %arg3: memref<1x32xf32, #tpu.memory_space<vmem>>, %arg4: memref<3x32xf32, #tpu.memory_space<vmem>>, %arg5: memref<4x32xf32, #tpu.memory_space<vmem>>) attributes {dimension_semantics = [#tpu.dimension_semantics<parallel>], iteration_bounds = array<i64: 1>, scalar_prefetch = 0 : i64, scratch_operands = 0 : i64, tpu.core_type = #tpu.core_type<tc>, window_params = [{transform_indices = @transform_0, window_bounds = array<i64: 4, 32>}, {pipeline_mode = #tpu.pipeline_mode<synchronous>, transform_indices = @transform_1, window_bounds = array<i64: 1, 32>}, {pipeline_mode = #tpu.pipeline_mode<synchronous>, transform_indices = @transform_2, window_bounds = array<i64: 1, 32>}, {pipeline_mode = #tpu.pipeline_mode<synchronous>, transform_indices = @transform_3, window_bounds = array<i64: 3, 32>}, {transform_indices = @transform_4, window_bounds = array<i64: 4, 32>}]} {
    %c0 = arith.constant 0 : index
    %c0_0 = arith.constant 0 : index
    %0 = vector.load %arg1[%c0, %c0_0] : memref<4x32xf32, #tpu.memory_space<vmem>>, vector<4x32xf32>
    %c0_1 = arith.constant 0 : index
    %c0_2 = arith.constant 0 : index
    %1 = vector.load %arg2[%c0_1, %c0_2] : memref<1x32xf32, #tpu.memory_space<vmem>>, vector<1x32xf32>
    %cst = arith.constant 5.000000e-01 : f32
    %2 = vector.broadcast %cst : f32 to vector<1x32xf32>
    %3 = arith.cmpf ogt, %1, %2 : vector<1x32xf32>
    %c0_3 = arith.constant 0 : index
    %c0_4 = arith.constant 0 : index
    %4 = vector.load %arg3[%c0_3, %c0_4] : memref<1x32xf32, #tpu.memory_space<vmem>>, vector<1x32xf32>
    %cst_5 = arith.constant 5.000000e-01 : f32
    %5 = vector.broadcast %cst_5 : f32 to vector<1x32xf32>
    %6 = arith.cmpf ogt, %4, %5 : vector<1x32xf32>
    %c0_6 = arith.constant 0 : index
    %c0_7 = arith.constant 0 : index
    %7 = vector.load %arg4[%c0_6, %c0_7] : memref<3x32xf32, #tpu.memory_space<vmem>>, vector<3x32xf32>
    %cst_8 = arith.constant 0.000000e+00 : f32
    %cst_9 = arith.constant 1.000000e+00 : f32
    %8 = vector.broadcast %cst_8 : f32 to vector<4x32xf32>
    %9 = arith.maximumf %8, %0 : vector<4x32xf32>
    %10 = vector.broadcast %cst_9 : f32 to vector<4x32xf32>
    %11 = arith.minimumf %10, %9 : vector<4x32xf32>
    %12 = vector.shape_cast %3 : vector<1x32xi1> to vector<1x32xi1>
    %13 = vector.broadcast %12 : vector<1x32xi1> to vector<4x32xi1>
    %14 = arith.select %13, %11, %0 : vector<4x32xi1>, vector<4x32xf32>
    %cst_10 = arith.constant -1.000000e+30 : f32
    %15 = vector.shape_cast %6 : vector<1x32xi1> to vector<1x32xi1>
    %16 = vector.broadcast %15 : vector<1x32xi1> to vector<4x32xi1>
    %17 = vector.broadcast %cst_10 : f32 to vector<4x32xf32>
    %18 = arith.select %16, %0, %17 : vector<4x32xi1>, vector<4x32xf32>
    %cst_11 = arith.constant dense<0xFF800000> : vector<4xf32>
    %19 = vector.multi_reduction <maximumf>, %18, %cst_11 [1] : vector<4x32xf32> to vector<4xf32>
    %20 = vector.shape_cast %19 : vector<4xf32> to vector<4x1xf32>
    %21 = vector.broadcast %20 : vector<4x1xf32> to vector<4x32xf32>
    %22 = arith.subf %18, %21 : vector<4x32xf32>
    %23 = math.exp %22 : vector<4x32xf32>
    %cst_12 = arith.constant dense<0.000000e+00> : vector<4x3xf32>
    %24 = tpu.matmul %23, %7, %cst_12 {dimension_numbers = #tpu.dot_dimension_numbers<[1], [1], [0], [0], [0, 0, 1, 0], [], []>, precision = #tpu.contract_precision<fp32>} : vector<4x32xf32>, vector<3x32xf32>, vector<4x3xf32> -> vector<4x3xf32>
    %cst_13 = arith.constant 1.000000e-30 : f32
    %25 = vector.broadcast %cst_13 : f32 to vector<4x3xf32>
    %26 = arith.maximumf %24, %25 : vector<4x3xf32>
    %cst_14 = arith.constant 1.000000e+00 : f32
    %27 = vector.broadcast %cst_14 : f32 to vector<4x3xf32>
    %28 = arith.divf %27, %26 : vector<4x3xf32>
    %cst_15 = arith.constant dense<0.000000e+00> : vector<4x32xf32>
    %29 = tpu.matmul %28, %7, %cst_15 {dimension_numbers = #tpu.dot_dimension_numbers<[1], [0], [0], [1], [0, 0, 1, 1], [], []>, precision = #tpu.contract_precision<fp32>} : vector<4x3xf32>, vector<3x32xf32>, vector<4x32xf32> -> vector<4x32xf32>
    %30 = arith.mulf %23, %29 : vector<4x32xf32>
    %31 = vector.shape_cast %6 : vector<1x32xi1> to vector<1x32xi1>
    %32 = vector.broadcast %31 : vector<1x32xi1> to vector<4x32xi1>
    %33 = arith.select %32, %30, %14 : vector<4x32xi1>, vector<4x32xf32>
    %c0_16 = arith.constant 0 : index
    %c0_17 = arith.constant 0 : index
    %34 = vector.load %arg5[%c0_16, %c0_17] : memref<4x32xf32, #tpu.memory_space<vmem>>, vector<4x32xf32>
    tpu.vector_store %arg5[%c0_16, %c0_17], %33 {strides = array<i32>} : memref<4x32xf32, #tpu.memory_space<vmem>>, vector<4x32xf32>,
    return
  }
  func.func @transform_0(%arg0: i32) -> (i32, i32) {
    %c0_i32 = arith.constant 0 : i32
    %c0_i32_0 = arith.constant 0 : i32
    return %arg0, %c0_i32 : i32, i32
  }
  func.func @transform_1(%arg0: i32) -> (i32, i32) {
    %c0_i32 = arith.constant 0 : i32
    %c0_i32_0 = arith.constant 0 : i32
    %c0_i32_1 = arith.constant 0 : i32
    return %c0_i32, %c0_i32_0 : i32, i32
  }
  func.func @transform_2(%arg0: i32) -> (i32, i32) {
    %c0_i32 = arith.constant 0 : i32
    %c0_i32_0 = arith.constant 0 : i32
    %c0_i32_1 = arith.constant 0 : i32
    return %c0_i32, %c0_i32_0 : i32, i32
  }
  func.func @transform_3(%arg0: i32) -> (i32, i32) {
    %c0_i32 = arith.constant 0 : i32
    %c0_i32_0 = arith.constant 0 : i32
    %c0_i32_1 = arith.constant 0 : i32
    return %c0_i32, %c0_i32_0 : i32, i32
  }
  func.func @transform_4(%arg0: i32) -> (i32, i32) {
    %c0_i32 = arith.constant 0 : i32
    %c0_i32_0 = arith.constant 0 : i32
    return %arg0, %c0_i32 : i32, i32
  }
}

</mosaic_0001>

<llo_original>
// kernel: tpu_custom_call.1
$region0: #{tpu_custom_call.1}
  #allocation0 [shape = 'u32[]', space=smem, size = 0x4, offset = 0x4, fixed_abs, tag = 'smem constant byte address 0x4 - core index']
  #allocation1 [shape = 'u32[72,128]{1,0:T(1,128)}', space=vmem, size = 0x9000, scoped, tag = 'internal scratch']
  %s0 = inlined_call_operand.hbm [shape: f32[4,32], index: 0, kind: input, shape index: {}]
  %s1 = inlined_call_operand.hbm [shape: f32[1,32], index: 1, kind: input, shape index: {}]
  %s2 = inlined_call_operand.vmem [shape: f32[1,32], index: 2, kind: input, shape index: {}]
  %s3 = inlined_call_operand.hbm [shape: f32[3,32], index: 3, kind: input, shape index: {}]
  %s4 = inlined_call_operand.hbm [shape: f32[4,32], index: 4, kind: output, shape index: {}]
  %s5 = sld [smem:[#allocation0]]
  $region38: #{tpu_custom_call.1} parent=0
    _
  %s7 = ssub.s32 1, %s5
  %s8 = scalar_select 0, %s7, %s5
  $region1: #{tpu_custom_call.1} parent=0
    #allocation2 [shape = 'u8[2048]{0}', space=vmem, size = 0x800, scoped, tag = 'input window, operand 0, single buffered']
    #allocation3 [shape = 's32[1]{0}', space=sflag, size = 0x4, scoped, tag = 'scoped memory for tpu_custom_call.1']
    #allocation4 [shape = 's32[1]{0}', space=sflag, size = 0x4, scoped, tag = 'scoped memory for tpu_custom_call.1']
    #allocation5 [shape = 'u8[512]{0}', space=vmem, size = 0x400, scoped, tag = 'input window, operand 1, single buffered']
    #allocation6 [shape = 's32[1]{0}', space=sflag, size = 0x4, scoped, tag = 'scoped memory for tpu_custom_call.1']
    #allocation7 [shape = 'u8[2048]{0}', space=vmem, size = 0x800, scoped, tag = 'input window, operand 3, single buffered']
    #allocation8 [shape = 'u8[2048]{0}', space=vmem, size = 0x800, scoped, tag = 'output window, operand 0, single buffered']
    %9 = vsyncpa [#allocation3], 0
    %10 = vsyncpa [#allocation6], 0
    %11 = vsyncpa [#allocation4], 0
    // Predicated region
    $region2: #{tpu_custom_call.1} parent=1 // pred_check
      _
    $region3: #{tpu_custom_call.1} parent=1 // pred_check_branch
      %13 = sbr.rel (0) target = $region5
    $region4: #{tpu_custom_call.1} parent=1 // pred_region
      %15 = vsyncadd [#allocation3], 0
      %s17 = sshll.u32 %s0, 4
      %s18 = int_to_ptr.hbm [resolvable:$true] %s17
      %s19 = sshll.u32 [#allocation2], 4
      %s20 = int_to_ptr.vmem [resolvable:$true] %s19
      %22 = dma.hbm_to_vmem [thread:$0]  %s18, 64, %s20, [#allocation3]
    $region5: #{tpu_custom_call.1} parent=1 // pred_fallthru
      _
    // Predicated region
    $region6: #{tpu_custom_call.1} parent=1 // pred_check
      _
    $region7: #{tpu_custom_call.1} parent=1 // pred_check_branch
      %24 = sbr.rel (0) target = $region9
    $region8: #{tpu_custom_call.1} parent=1 // pred_region
      %26 = vsyncadd [#allocation6], 0
      %s28 = sshll.u32 %s1, 4
      %s29 = int_to_ptr.hbm [resolvable:$true] %s28
      %s30 = sshll.u32 [#allocation5], 4
      %s31 = int_to_ptr.vmem [resolvable:$true] %s30
      %33 = dma.hbm_to_vmem [thread:$0]  %s29, 16, %s31, [#allocation6]
    $region9: #{tpu_custom_call.1} parent=1 // pred_fallthru
      _
    // Predicated region
    $region10: #{tpu_custom_call.1} parent=1 // pred_check
      _
    $region11: #{tpu_custom_call.1} parent=1 // pred_check_branch
      %35 = sbr.rel (0) target = $region13
    $region12: #{tpu_custom_call.1} parent=1 // pred_region
      _
    $region13: #{tpu_custom_call.1} parent=1 // pred_fallthru
      _
    // Predicated region
    $region14: #{tpu_custom_call.1} parent=1 // pred_check
      _
    $region15: #{tpu_custom_call.1} parent=1 // pred_check_branch
      %37 = sbr.rel (0) target = $region17
    $region16: #{tpu_custom_call.1} parent=1 // pred_region
      %39 = vsyncadd [#allocation6], 0
      %s41 = sshll.u32 %s3, 4
      %s42 = int_to_ptr.hbm [resolvable:$true] %s41
      %s43 = sshll.u32 [#allocation7], 4
      %s44 = int_to_ptr.vmem [resolvable:$true] %s43
      %46 = dma.hbm_to_vmem [thread:$0]  %s42, 64, %s44, [#allocation6]
    $region17: #{tpu_custom_call.1} parent=1 // pred_fallthru
      _
    // Predicated region
    $region18: #{tpu_custom_call.1} parent=1 // pred_check
      _
    $region19: #{tpu_custom_call.1} parent=1 // pred_check_branch
      %48 = sbr.rel (0) target = $region21
    $region20: #{tpu_custom_call.1} parent=1 // pred_region
      %50 = dma.done [#allocation3], 64
    $region21: #{tpu_custom_call.1} parent=1 // pred_fallthru
      _
    // Predicated region
    $region22: #{tpu_custom_call.1} parent=1 // pred_check
      _
    $region23: #{tpu_custom_call.1} parent=1 // pred_check_branch
      %52 = sbr.rel (0) target = $region25
    $region24: #{tpu_custom_call.1} parent=1 // pred_region
      %54 = dma.done [#allocation6], 16
    $region25: #{tpu_custom_call.1} parent=1 // pred_fallthru
      _
    // Predicated region
    $region26: #{tpu_custom_call.1} parent=1 // pred_check
      _
    $region27: #{tpu_custom_call.1} parent=1 // pred_check_branch
      %56 = sbr.rel (0) target = $region29
    $region28: #{tpu_custom_call.1} parent=1 // pred_region
      %58 = dma.done [#allocation6], 64
    $region29: #{tpu_custom_call.1} parent=1 // pred_fallthru
      _
    %v59 = vld [vmem:[#allocation2] sm:$0xf]
    %v60 = vld [vmem:[#allocation5] sm:$0x1]
    %vm61 = vcmp.gt.f32.partialorder %v60, 0.5
    %v62 = vld [vmem:[%s2] sm:$0x1]
    %vm63 = vcmp.gt.f32.partialorder %v62, 0.5
    %v64 = vld [vmem:[#allocation7] sm:$0x7]
    %v65 = vmax.f32 %v59, 0.0
    %v66 = vmin.f32 %v65, 1.0
    %v67 = vsel %vm61, 1, 0
    %v68 = vperm.slane %v67, 0
    %vm69 = vcmp.eq.s32.totalorder %v68, 1
    %v70 = vsel %vm69, %v66, %v59
    %v71 = vsel %vm63, 1, 0
    %v72 = vperm.slane %v71, 0
    %vm73 = vcmp.eq.s32.totalorder %v72, 1
    %v74 = vsel %vm73, %v59, -1e+30
    %vm75 = vcmask 257024
    %v76 = vsel %vm75, %v74, -inf
    %77 = vmax.xlane.f32.xlu0 %v76
    %v78 = vpop.xlane.xlu0 %77
    %v79 = vsub.f32 %v74, %v78
    %v80 = vmul.f32 %v79, 1.442695
    %v81 = vpow.pop %v80
    %vm82 = vcmask 261120
    %v84 = vsel %vm82, %v81, 0
    %v87 = vsel %vm82, %v64, 0
    %89 = vmatpush.xpose.msra.mxu0 0.0
    %90 = vmatpush.xpose.msra.mxu0 0.0
    %91 = vmatpush.xpose.msra.mxu0 0.0
    %92 = vmatpush.xpose.msra.mxu0 0.0
    %93 = vmatpush.xpose.msra.mxu0 0.0
    %94 = vmatpush.xpose.msra.mxu0 0.0
    %95 = vmatpush.xpose.msra.mxu0 0.0
    %96 = vmatpush.xpose.msra.mxu0 0.0
    %97 = vmatpush.xpose.msra.mxu0 0.0
    %98 = vmatpush.xpose.msra.mxu0 0.0
    %99 = vmatpush.xpose.msra.mxu0 0.0
    %100 = vmatpush.xpose.msra.mxu0 0.0
    %101 = vmatpush.xpose.msra.mxu0 0.0
    %102 = vmatpush.xpose.msra.mxu0 0.0
    %103 = vmatpush.xpose.msra.mxu0 0.0
    %v104 = vand.u32 %v87, 4294901760
    %105 = vmatpush.xpose.msra.mxu0 %v104
    %v106 = vand.u32 %v84, 4294901760
    %v107 = vsub.f32 %v84, %v106
    %v108 = vand.u32 %v107, 4294901760
    %v109 = vsub.f32 %v107, %v108
    %v110 = vand.u32 %v109, 4294901760
    %111 = vmatmul.f32.gmra.mxu0 %v110
    %v112 = vpop.f32.mrf.mxu0
    %v113 = vadd.f32 0.0, %v112
    %114 = vdwg.mxu0
    %115 = vmatpush.xpose.msra.mxu0 0.0
    %116 = vmatpush.xpose.msra.mxu0 0.0
    %117 = vmatpush.xpose.msra.mxu0 0.0
    %118 = vmatpush.xpose.msra.mxu0 0.0
    %119 = vmatpush.xpose.msra.mxu0 0.0
    %120 = vmatpush.xpose.msra.mxu0 0.0
    %121 = vmatpush.xpose.msra.mxu0 0.0
    %122 = vmatpush.xpose.msra.mxu0 0.0
    %123 = vmatpush.xpose.msra.mxu0 0.0
    %124 = vmatpush.xpose.msra.mxu0 0.0
    %125 = vmatpush.xpose.msra.mxu0 0.0
    %126 = vmatpush.xpose.msra.mxu0 0.0
    %127 = vmatpush.xpose.msra.mxu0 0.0
    %128 = vmatpush.xpose.msra.mxu0 0.0
    %129 = vmatpush.xpose.msra.mxu0 0.0
    %v130 = vand.u32 %v87, 4294901760
    %v131 = vsub.f32 %v87, %v130
    %v132 = vand.u32 %v131, 4294901760
    %v133 = vsub.f32 %v131, %v132
    %v134 = vand.u32 %v133, 4294901760
    %135 = vmatpush.xpose.msra.mxu0 %v134
    %v136 = vand.u32 %v84, 4294901760
    %137 = vmatmul.f32.gmra.mxu0 %v136
    %v138 = vpop.f32.mrf.mxu0
    %v139 = vadd.f32 %v113, %v138
    %140 = vdwg.mxu0
    %141 = vmatpush.xpose.msra.mxu0 0.0
    %142 = vmatpush.xpose.msra.mxu0 0.0
    %143 = vmatpush.xpose.msra.mxu0 0.0
    %144 = vmatpush.xpose.msra.mxu0 0.0
    %145 = vmatpush.xpose.msra.mxu0 0.0
    %146 = vmatpush.xpose.msra.mxu0 0.0
    %147 = vmatpush.xpose.msra.mxu0 0.0
    %148 = vmatpush.xpose.msra.mxu0 0.0
    %149 = vmatpush.xpose.msra.mxu0 0.0
    %150 = vmatpush.xpose.msra.mxu0 0.0
    %151 = vmatpush.xpose.msra.mxu0 0.0
    %152 = vmatpush.xpose.msra.mxu0 0.0
    %153 = vmatpush.xpose.msra.mxu0 0.0
    %154 = vmatpush.xpose.msra.mxu0 0.0
    %155 = vmatpush.xpose.msra.mxu0 0.0
    %v156 = vand.u32 %v87, 4294901760
    %v157 = vsub.f32 %v87, %v156
    %158 = vmatpush.xpose.msra.mxu0 %v157
    %v159 = vand.u32 %v84, 4294901760
    %v160 = vsub.f32 %v84, %v159
    %161 = vmatmul.f32.gmra.mxu0 %v160
    %v162 = vpop.f32.mrf.mxu0
    %v163 = vadd.f32 %v139, %v162
    %164 = vdwg.mxu0
    %165 = vmatpush.xpose.msra.mxu0 0.0
    %166 = vmatpush.xpose.msra.mxu0 0.0
    %167 = vmatpush.xpose.msra.mxu0 0.0
    %168 = vmatpush.xpose.msra.mxu0 0.0
    %169 = vmatpush.xpose.msra.mxu0 0.0
    %170 = vmatpush.xpose.msra.mxu0 0.0
    %171 = vmatpush.xpose.msra.mxu0 0.0
    %172 = vmatpush.xpose.msra.mxu0 0.0
    %173 = vmatpush.xpose.msra.mxu0 0.0
    %174 = vmatpush.xpose.msra.mxu0 0.0
    %175 = vmatpush.xpose.msra.mxu0 0.0
    %176 = vmatpush.xpose.msra.mxu0 0.0
    %177 = vmatpush.xpose.msra.mxu0 0.0
    %178 = vmatpush.xpose.msra.mxu0 0.0
    %179 = vmatpush.xpose.msra.mxu0 0.0
    %v180 = vand.u32 %v87, 4294901760
    %181 = vmatpush.xpose.msra.mxu0 %v180
    %v182 = vand.u32 %v84, 4294901760
    %v183 = vsub.f32 %v84, %v182
    %v184 = vand.u32 %v183, 4294901760
    %185 = vmatmul.f32.gmra.mxu0 %v184
    %v186 = vpop.f32.mrf.mxu0
    %v187 = vadd.f32 %v163, %v186
    %188 = vdwg.mxu0
    %189 = vmatpush.xpose.msra.mxu0 0.0
    %190 = vmatpush.xpose.msra.mxu0 0.0
    %191 = vmatpush.xpose.msra.mxu0 0.0
    %192 = vmatpush.xpose.msra.mxu0 0.0
    %193 = vmatpush.xpose.msra.mxu0 0.0
    %194 = vmatpush.xpose.msra.mxu0 0.0
    %195 = vmatpush.xpose.msra.mxu0 0.0
    %196 = vmatpush.xpose.msra.mxu0 0.0
    %197 = vmatpush.xpose.msra.mxu0 0.0
    %198 = vmatpush.xpose.msra.mxu0 0.0
    %199 = vmatpush.xpose.msra.mxu0 0.0
    %200 = vmatpush.xpose.msra.mxu0 0.0
    %201 = vmatpush.xpose.msra.mxu0 0.0
    %202 = vmatpush.xpose.msra.mxu0 0.0
    %203 = vmatpush.xpose.msra.mxu0 0.0
    %v204 = vand.u32 %v87, 4294901760
    %v205 = vsub.f32 %v87, %v204
    %v206 = vand.u32 %v205, 4294901760
    %207 = vmatpush.xpose.msra.mxu0 %v206
    %v208 = vand.u32 %v84, 4294901760
    %209 = vmatmul.f32.gmra.mxu0 %v208
    %v210 = vpop.f32.mrf.mxu0
    %v211 = vadd.f32 %v187, %v210
    %212 = vdwg.mxu0
    %213 = vmatpush.xpose.msra.mxu0 0.0
    %214 = vmatpush.xpose.msra.mxu0 0.0
    %215 = vmatpush.xpose.msra.mxu0 0.0
    %216 = vmatpush.xpose.msra.mxu0 0.0
    %217 = vmatpush.xpose.msra.mxu0 0.0
    %218 = vmatpush.xpose.msra.mxu0 0.0
    %219 = vmatpush.xpose.msra.mxu0 0.0
    %220 = vmatpush.xpose.msra.mxu0 0.0
    %221 = vmatpush.xpose.msra.mxu0 0.0
    %222 = vmatpush.xpose.msra.mxu0 0.0
    %223 = vmatpush.xpose.msra.mxu0 0.0
    %224 = vmatpush.xpose.msra.mxu0 0.0
    %225 = vmatpush.xpose.msra.mxu0 0.0
    %226 = vmatpush.xpose.msra.mxu0 0.0
    %227 = vmatpush.xpose.msra.mxu0 0.0
    %v228 = vand.u32 %v87, 4294901760
    %229 = vmatpush.xpose.msra.mxu0 %v228
    %v230 = vand.u32 %v84, 4294901760
    %231 = vmatmul.f32.gmra.mxu0 %v230
    %v232 = vpop.f32.mrf.mxu0
    %v233 = vadd.f32 %v211, %v232
    %234 = vdwg.mxu0
    %v235 = vmax.f32 %v233, 1e-30
    %v236 = vrcp.pop %v235
    %v237 = vmul.f32 %v235, %v236
    %v238 = vsub.f32 1.0, %v237
    %v239 = vmul.f32 %v236, %v238
    %v240 = vadd.f32 %v236, %v239
    %vm241 = vweird.f32 %v235
    %vm242 = vweird.f32 %v236
    %vm243 = vmor %vm241, %vm242
    %v244 = vsel %vm243, %v236, %v240
    %v245 = vand.u32 2147483647, %v235
    %vm246 = vcmp.eq.f32.partialorder %v245, 8.507059e+37
    %v247 = vand.u32 %v235, 2147483648
    %v248 = vor.u32 1.1754944e-38, %v247
    %v249 = vsel %vm246, %v248, %v244
    %v250 = vmul.f32 1.0, %v249
    %vm251 = vcmask 23552
    %v253 = vsel %vm251, %v250, 0
    %vm255 = vcmask 1042432
    %v256 = vsel %vm255, %v64, 0
    %258 = vmatpush.msra.mxu0 0.0
    %259 = vmatpush.msra.mxu0 0.0
    %260 = vmatpush.msra.mxu0 0.0
    %261 = vmatpush.msra.mxu0 0.0
    %262 = vmatpush.msra.mxu0 0.0
    %263 = vmatpush.msra.mxu0 0.0
    %264 = vmatpush.msra.mxu0 0.0
    %265 = vmatpush.msra.mxu0 0.0
    %266 = vmatpush.msra.mxu0 0.0
    %267 = vmatpush.msra.mxu0 0.0
    %268 = vmatpush.msra.mxu0 0.0
    %269 = vmatpush.msra.mxu0 0.0
    %270 = vmatpush.msra.mxu0 0.0
    %271 = vmatpush.msra.mxu0 0.0
    %272 = vmatpush.msra.mxu0 0.0
    %v273 = vand.u32 %v256, 4294901760
    %274 = vmatpush.msra.mxu0 %v273
    %v275 = vand.u32 %v253, 4294901760
    %v276 = vsub.f32 %v253, %v275
    %v277 = vand.u32 %v276, 4294901760
    %v278 = vsub.f32 %v276, %v277
    %v279 = vand.u32 %v278, 4294901760
    %280 = vmatmul.f32.gmra.mxu0 %v279
    %v281 = vpop.f32.mrf.mxu0
    %v282 = vadd.f32 0.0, %v281
    %283 = vdwg.mxu0
    %284 = vmatpush.msra.mxu0 0.0
    %285 = vmatpush.msra.mxu0 0.0
    %286 = vmatpush.msra.mxu0 0.0
    %287 = vmatpush.msra.mxu0 0.0
    %288 = vmatpush.msra.mxu0 0.0
    %289 = vmatpush.msra.mxu0 0.0
    %290 = vmatpush.msra.mxu0 0.0
    %291 = vmatpush.msra.mxu0 0.0
    %292 = vmatpush.msra.mxu0 0.0
    %293 = vmatpush.msra.mxu0 0.0
    %294 = vmatpush.msra.mxu0 0.0
    %295 = vmatpush.msra.mxu0 0.0
    %296 = vmatpush.msra.mxu0 0.0
    %297 = vmatpush.msra.mxu0 0.0
    %298 = vmatpush.msra.mxu0 0.0
    %v299 = vand.u32 %v256, 4294901760
    %v300 = vsub.f32 %v256, %v299
    %v301 = vand.u32 %v300, 4294901760
    %v302 = vsub.f32 %v300, %v301
    %v303 = vand.u32 %v302, 4294901760
    %304 = vmatpush.msra.mxu0 %v303
    %v305 = vand.u32 %v253, 4294901760
    %306 = vmatmul.f32.gmra.mxu0 %v305
    %v307 = vpop.f32.mrf.mxu0
    %v308 = vadd.f32 %v282, %v307
    %309 = vdwg.mxu0
    %310 = vmatpush.msra.mxu0 0.0
    %311 = vmatpush.msra.mxu0 0.0
    %312 = vmatpush.msra.mxu0 0.0
    %313 = vmatpush.msra.mxu0 0.0
    %314 = vmatpush.msra.mxu0 0.0
    %315 = vmatpush.msra.mxu0 0.0
    %316 = vmatpush.msra.mxu0 0.0
    %317 = vmatpush.msra.mxu0 0.0
    %318 = vmatpush.msra.mxu0 0.0
    %319 = vmatpush.msra.mxu0 0.0
    %320 = vmatpush.msra.mxu0 0.0
    %321 = vmatpush.msra.mxu0 0.0
    %322 = vmatpush.msra.mxu0 0.0
    %323 = vmatpush.msra.mxu0 0.0
    %324 = vmatpush.msra.mxu0 0.0
    %v325 = vand.u32 %v256, 4294901760
    %v326 = vsub.f32 %v256, %v325
    %327 = vmatpush.msra.mxu0 %v326
    %v328 = vand.u32 %v253, 4294901760
    %v329 = vsub.f32 %v253, %v328
    %330 = vmatmul.f32.gmra.mxu0 %v329
    %v331 = vpop.f32.mrf.mxu0
    %v332 = vadd.f32 %v308, %v331
    %333 = vdwg.mxu0
    %334 = vmatpush.msra.mxu0 0.0
    %335 = vmatpush.msra.mxu0 0.0
    %336 = vmatpush.msra.mxu0 0.0
    %337 = vmatpush.msra.mxu0 0.0
    %338 = vmatpush.msra.mxu0 0.0
    %339 = vmatpush.msra.mxu0 0.0
    %340 = vmatpush.msra.mxu0 0.0
    %341 = vmatpush.msra.mxu0 0.0
    %342 = vmatpush.msra.mxu0 0.0
    %343 = vmatpush.msra.mxu0 0.0
    %344 = vmatpush.msra.mxu0 0.0
    %345 = vmatpush.msra.mxu0 0.0
    %346 = vmatpush.msra.mxu0 0.0
    %347 = vmatpush.msra.mxu0 0.0
    %348 = vmatpush.msra.mxu0 0.0
    %v349 = vand.u32 %v256, 4294901760
    %350 = vmatpush.msra.mxu0 %v349
    %v351 = vand.u32 %v253, 4294901760
    %v352 = vsub.f32 %v253, %v351
    %v353 = vand.u32 %v352, 4294901760
    %354 = vmatmul.f32.gmra.mxu0 %v353
    %v355 = vpop.f32.mrf.mxu0
    %v356 = vadd.f32 %v332, %v355
    %357 = vdwg.mxu0
    %358 = vmatpush.msra.mxu0 0.0
    %359 = vmatpush.msra.mxu0 0.0
    %360 = vmatpush.msra.mxu0 0.0
    %361 = vmatpush.msra.mxu0 0.0
    %362 = vmatpush.msra.mxu0 0.0
    %363 = vmatpush.msra.mxu0 0.0
    %364 = vmatpush.msra.mxu0 0.0
    %365 = vmatpush.msra.mxu0 0.0
    %366 = vmatpush.msra.mxu0 0.0
    %367 = vmatpush.msra.mxu0 0.0
    %368 = vmatpush.msra.mxu0 0.0
    %369 = vmatpush.msra.mxu0 0.0
    %370 = vmatpush.msra.mxu0 0.0
    %371 = vmatpush.msra.mxu0 0.0
    %372 = vmatpush.msra.mxu0 0.0
    %v373 = vand.u32 %v256, 4294901760
    %v374 = vsub.f32 %v256, %v373
    %v375 = vand.u32 %v374, 4294901760
    %376 = vmatpush.msra.mxu0 %v375
    %v377 = vand.u32 %v253, 4294901760
    %378 = vmatmul.f32.gmra.mxu0 %v377
    %v379 = vpop.f32.mrf.mxu0
    %v380 = vadd.f32 %v356, %v379
    %381 = vdwg.mxu0
    %382 = vmatpush.msra.mxu0 0.0
    %383 = vmatpush.msra.mxu0 0.0
    %384 = vmatpush.msra.mxu0 0.0
    %385 = vmatpush.msra.mxu0 0.0
    %386 = vmatpush.msra.mxu0 0.0
    %387 = vmatpush.msra.mxu0 0.0
    %388 = vmatpush.msra.mxu0 0.0
    %389 = vmatpush.msra.mxu0 0.0
    %390 = vmatpush.msra.mxu0 0.0
    %391 = vmatpush.msra.mxu0 0.0
    %392 = vmatpush.msra.mxu0 0.0
    %393 = vmatpush.msra.mxu0 0.0
    %394 = vmatpush.msra.mxu0 0.0
    %395 = vmatpush.msra.mxu0 0.0
    %396 = vmatpush.msra.mxu0 0.0
    %v397 = vand.u32 %v256, 4294901760
    %398 = vmatpush.msra.mxu0 %v397
    %v399 = vand.u32 %v253, 4294901760
    %400 = vmatmul.f32.gmra.mxu0 %v399
    %v401 = vpop.f32.mrf.mxu0
    %v402 = vadd.f32 %v380, %v401
    %403 = vdwg.mxu0
    %v404 = vmul.f32 %v81, %v402
    %v405 = vsel %vm73, %v404, %v70
    %406 = vst.msk [vmem:[#allocation8] sm:$0xf] %vm75, %v405
    // Predicated region
    $region30: #{tpu_custom_call.1} parent=1 // pred_check
      _
    $region31: #{tpu_custom_call.1} parent=1 // pred_check_branch
      %408 = sbr.rel (0) target = $region33
    $region32: #{tpu_custom_call.1} parent=1 // pred_region
      %410 = vsyncadd [#allocation4], 0
      %s412 = sshll.u32 [#allocation8], 4
      %s413 = int_to_ptr.vmem [resolvable:$true] %s412
      %s414 = sshll.u32 %s4, 4
      %s415 = int_to_ptr.hbm [resolvable:$true] %s414
      %417 = dma.vmem_to_hbm [thread:$0]  %s413, 64, %s415, [#allocation4]
    $region33: #{tpu_custom_call.1} parent=1 // pred_fallthru
      _
    // Predicated region
    $region34: #{tpu_custom_call.1} parent=1 // pred_check
      _
    $region35: #{tpu_custom_call.1} parent=1 // pred_check_branch
      %419 = sbr.rel (0) target = $region37
    $region36: #{tpu_custom_call.1} parent=1 // pred_region
      %421 = dma.done [#allocation4], 64
    $region37: #{tpu_custom_call.1} parent=1 // pred_fallthru
      _
    %422 = vsyncpa [#allocation3], 1
    %423 = vsyncpa [#allocation6], 1
    %424 = vsyncpa [#allocation4], 1

</llo_original>
